<compile_context>
chip_gen: v7x
topology: tpu7x:2x2x1
jax: 0.10.0
libtpu: 0.0.40
codegen_flags: <defaults>
</compile_context>

<pallas_src>
import functools

import jax
import jax.numpy as jnp
from jax.experimental import pallas as pl
from jax.experimental.pallas import tpu as pltpu

LOG_SIG_MAX = 2.0
LOG_SIG_MIN = -5.0

_LANES = 128        # TPU lane width
_MAX_TILE_B = 1024  # large-batch tile cap (256 was grid-step-overhead bound)


def _round_up(x, m):
    return (x + m - 1) // m * m


def _policy_kernel(x_ref, w1_ref, w2_ref, wh_ref, bias_ref, out_ref, *,
                   mlp_hidden, hidden, slab):
    # Fused biases: one f32 operand, sliced at 128-lane-aligned segment offsets.
    b1 = bias_ref[:, :mlp_hidden]
    b2 = bias_ref[:, mlp_hidden:mlp_hidden + hidden]
    bh = bias_ref[:, mlp_hidden + hidden:]

    # base.linear1 + relu  (bf16 MXU matmul, f32 accumulate, f32 epilogue)
    x = x_ref[...].astype(w1_ref.dtype)
    h1 = jnp.dot(x, w1_ref[...], preferred_element_type=jnp.float32) + b1
    h1 = jnp.maximum(h1, 0.0)

    # base.linear2 + relu
    h2 = jnp.dot(h1.astype(w2_ref.dtype), w2_ref[...],
                 preferred_element_type=jnp.float32) + b2
    h2 = jnp.maximum(h2, 0.0)

    # Fused heads, split-slab layout: lanes [0, slab) = mean, [slab, 2*slab) = logstd.
    heads = jnp.dot(h2.astype(wh_ref.dtype), wh_ref[...],
                    preferred_element_type=jnp.float32) + bh

    # Mask-free epilogue: mean slab passes through, clip+exp only on logstd slab.
    out_ref[:, :slab] = heads[:, :slab].astype(out_ref.dtype)
    out_ref[:, slab:] = jnp.exp(
        jnp.clip(heads[:, slab:], LOG_SIG_MIN, LOG_SIG_MAX)).astype(out_ref.dtype)


def prepare_params(params, compute_dtype=jnp.bfloat16):
    """One-time prep: pad hidden widths to 128-lane multiples, build the
    split-slab head weight (mean lanes [0,slab), logstd lanes [slab,2*slab)),
    fuse all biases into one f32 operand, and cast matmul weights to bf16.

    Zero-padding output features is exact: padded h1/h2 columns are relu(0)=0
    and the corresponding rows of the next weight are zero."""
    w1, b1, w2, b2, wm, bm, ws, bs = params
    num_obs, mlp_hidden = w1.shape
    hidden_dim = w2.shape[1]
    num_actions = wm.shape[1]

    mlp_hidden_p = _round_up(mlp_hidden, _LANES)
    hidden_p = _round_up(hidden_dim, _LANES)
    slab = max(_LANES, _round_up(num_actions, _LANES))

    w1p = jnp.pad(w1, ((0, 0), (0, mlp_hidden_p - mlp_hidden)))
    w2p = jnp.pad(w2, ((0, mlp_hidden_p - mlp_hidden), (0, hidden_p - hidden_dim)))
    wmp = jnp.pad(wm, ((0, hidden_p - hidden_dim), (0, slab - num_actions)))
    wsp = jnp.pad(ws, ((0, hidden_p - hidden_dim), (0, slab - num_actions)))
    whp = jnp.concatenate([wmp, wsp], axis=1)               # [hidden_p, 2*slab]

    bias = jnp.concatenate([
        jnp.pad(b1, ((0, 0), (0, mlp_hidden_p - mlp_hidden))),
        jnp.pad(b2, ((0, 0), (0, hidden_p - hidden_dim))),
        jnp.pad(bm, ((0, 0), (0, slab - num_actions))),
        jnp.pad(bs, ((0, 0), (0, slab - num_actions))),
    ], axis=1).astype(jnp.float32)    # [1, mlp_hidden_p + hidden_p + 2*slab]

    prepared = (w1p.astype(compute_dtype), w2p.astype(compute_dtype),
                whp.astype(compute_dtype), bias)
    return prepared, num_actions


def _select_tile(batch):
    """Small batches: one sublane-rounded tile (latency path). Large batches:
    tiles up to _MAX_TILE_B picked so padding waste stays small and there are
    >= 2 grid steps, so "parallel" can shard the batch across v7x's two TCs."""
    b8 = max(8, _round_up(batch, 8))
    if batch <= 256:
        return b8
    return min(_MAX_TILE_B, _round_up(pl.cdiv(b8, 2), 8))


@functools.partial(jax.jit, static_argnames=("num_actions",))
def mujoco_policy_forward(state, prepared, num_actions):
    """Returns (mean, std) of the action distribution Normal(mean, std)."""
    w1, w2, wh, bias = prepared
    B, num_obs = state.shape
    mlp_hidden_p = w1.shape[1]
    hidden_p = w2.shape[1]
    out_pad = wh.shape[1]          # 2 * slab, lane-dense
    slab = out_pad // 2

    tile_b = _select_tile(B)
    b_pad = _round_up(B, tile_b)
    state_p = jnp.pad(state, ((0, b_pad - B), (0, 0))) if b_pad != B else state
    grid = (b_pad // tile_b,)

    # Constant index_maps keep weights/bias VMEM-resident across grid steps.
    resident = lambda shape: pl.BlockSpec(shape, lambda i: (0, 0))

    # Explicit scoped-VMEM cap sized from the real footprint (v5e default is
    # 16 MiB scoped; v7x physical VMEM is 64 MiB, so cap well below it).
    weight_bytes = sum(a.size * a.dtype.itemsize for a in prepared)
    tile_io = tile_b * (num_obs + out_pad) * 4
    tile_tmp = tile_b * (mlp_hidden_p + hidden_p + out_pad) * 6  # f32 + bf16 temps
    vmem_limit = int(min(48 << 20,
                         max(2 * (tile_io + weight_bytes) + tile_tmp + (2 << 20),
                             16 << 20)))

    cost = pl.CostEstimate(
        flops=2 * b_pad * (num_obs * mlp_hidden_p
                           + mlp_hidden_p * hidden_p
                           + hidden_p * out_pad),
        transcendentals=b_pad * slab,
        bytes_accessed=state_p.size * 4 + weight_bytes + b_pad * out_pad * 4,
    )

    out = pl.pallas_call(
        functools.partial(_policy_kernel, mlp_hidden=mlp_hidden_p,
                          hidden=hidden_p, slab=slab),
        out_shape=jax.ShapeDtypeStruct((b_pad, out_pad), jnp.float32),
        grid=grid,
        in_specs=[
            pl.BlockSpec((tile_b, num_obs), lambda i: (i, 0)),   # state tile
            resident((num_obs, mlp_hidden_p)),                   # W1
            resident((mlp_hidden_p, hidden_p)),                  # W2
            resident((hidden_p, out_pad)),                       # W_heads
            resident((1, mlp_hidden_p + hidden_p + out_pad)),    # fused biases
        ],
        out_specs=pl.BlockSpec((tile_b, out_pad), lambda i: (i, 0)),
        compiler_params=pltpu.CompilerParams(
            dimension_semantics=("parallel",),   # batch tiles shard across cores
            vmem_limit_bytes=vmem_limit,
        ),
        cost_estimate=cost,
    )(state_p, w1, w2, wh, bias)

    mean = out[:B, :num_actions]
    std = out[:B, slab:slab + num_actions]
    return mean, std


def init_params(key, num_obs, num_actions, hidden_dim=256, mlp_hidden=256):
    """Deterministic xavier-uniform-style init (weights_init_ analogue).

    Weights stored pre-transposed as [in, out]; biases as [1, out]."""
    ks = jax.random.split(key, 8)

    def xavier(k, fan_in, fan_out):
        bound = jnp.sqrt(6.0 / (fan_in + fan_out))
        return jax.random.uniform(k, (fan_in, fan_out), jnp.float32, -bound, bound)

    def bias(k, n):
        return jax.random.uniform(k, (1, n), jnp.float32, -0.05, 0.05)

    w1 = xavier(ks[0], num_obs, mlp_hidden)
    b1 = bias(ks[1], mlp_hidden)
    w2 = xavier(ks[2], mlp_hidden, hidden_dim)
    b2 = bias(ks[3], hidden_dim)
    wm = xavier(ks[4], hidden_dim, num_actions)
    bm = bias(ks[5], num_actions)
    ws = xavier(ks[6], hidden_dim, num_actions)
    bs = bias(ks[7], num_actions)
    return (w1, b1, w2, b2, wm, bm, ws, bs)


def reference_forward(state, prepared, num_actions):
    """Pure-JAX reference of the same math using the prepared (bf16, padded)
    weights upcast to f32 — isolates the kernel's bf16 activation rounding."""
    w1, w2, wh, bias = prepared
    mlp_hidden_p = w1.shape[1]
    hidden_p = w2.shape[1]
    slab = wh.shape[1] // 2
    b1 = bias[:, :mlp_hidden_p]
    b2 = bias[:, mlp_hidden_p:mlp_hidden_p + hidden_p]
    bh = bias[:, mlp_hidden_p + hidden_p:]
    h1 = jnp.maximum(state @ w1.astype(jnp.float32) + b1, 0.0)
    h2 = jnp.maximum(h1 @ w2.astype(jnp.float32) + b2, 0.0)
    heads = h2 @ wh.astype(jnp.float32) + bh
    mean = heads[:, :num_actions]
    logstd = jnp.clip(heads[:, slab:slab + num_actions], LOG_SIG_MIN, LOG_SIG_MAX)
    return mean, jnp.exp(logstd)


if __name__ == "__main__":
    key = jax.random.PRNGKey(0)
    k_state, k_state2, k_params = jax.random.split(key, 3)

    B = 8            # batch of states (small-batch latency path)
    NUM_OBS = 32     # observation dim
    HIDDEN_DIM = 32  # MujocoPolicy hidden_dim (heads' input dim)
    NUM_ACTIONS = 8  # action dim

    raw_params = init_params(k_params, NUM_OBS, NUM_ACTIONS, hidden_dim=HIDDEN_DIM)

    # One-time param prep (padded split-slab heads, fused biases, bf16 weights);
    # keep device-resident across steps — no per-step host round trips.
    prepared, num_actions = prepare_params(raw_params)
    prepared = jax.block_until_ready(prepared)

    # --- small batch: single tile, single grid step ---
    state = jax.random.normal(k_state, (B, NUM_OBS), jnp.float32)
    mean, std = mujoco_policy_forward(state, prepared, num_actions)
    jax.block_until_ready((mean, std))
    assert mean.shape == (B, NUM_ACTIONS) and std.shape == (B, NUM_ACTIONS)

    ref_mean, ref_std = reference_forward(state, prepared, num_actions)
    assert jnp.allclose(mean, ref_mean, atol=3e-2, rtol=3e-2), "mean mismatch"
    assert jnp.allclose(std, ref_std, atol=3e-2, rtol=3e-2), "std mismatch"
    assert bool(jnp.all(std > 0.0)), "std must be positive"

    # --- larger batch: exercises the multi-tile "parallel" grid path ---
    B2 = 640
    state2 = jax.random.normal(k_state2, (B2, NUM_OBS), jnp.float32)
    mean2, std2 = mujoco_policy_forward(state2, prepared, num_actions)
    jax.block_until_ready((mean2, std2))
    ref_mean2, ref_std2 = reference_forward(state2, prepared, num_actions)
    assert jnp.allclose(mean2, ref_mean2, atol=3e-2, rtol=3e-2), "mean mismatch (B2)"
    assert jnp.allclose(std2, ref_std2, atol=3e-2, rtol=3e-2), "std mismatch (B2)"

    # greedy_action-style post-processing (plain JAX glue, not the hot path):
    action_scale, action_bias = 1.0, 0.0
    greedy = jnp.tanh(mean) * action_scale + action_bias
    jax.block_until_ready(greedy)

    # TODO(synk): Normal.rsample / log_prob (sample_random_action) need RNG and
    # distribution plumbing outside the kernel; kernel emits (mean, std) only.
    print("KERNEL_OK")
</pallas_src>

<mosaic_0001>
module attributes {stable_mosaic.version = 11 : i64} {
  func.func @_policy_kernel(%arg0: i32, %arg1: memref<8x32xf32, #tpu.memory_space<vmem>>, %arg2: memref<32x256xbf16, #tpu.memory_space<vmem>>, %arg3: memref<256x128xbf16, #tpu.memory_space<vmem>>, %arg4: memref<128x256xbf16, #tpu.memory_space<vmem>>, %arg5: memref<1x640xf32, #tpu.memory_space<vmem>>, %arg6: memref<8x256xf32, #tpu.memory_space<vmem>>) attributes {dimension_semantics = [#tpu.dimension_semantics<parallel>], iteration_bounds = array<i64: 1>, scalar_prefetch = 0 : i64, scratch_operands = 0 : i64, tpu.core_type = #tpu.core_type<tc>, window_params = [{transform_indices = @transform_0, window_bounds = array<i64: 8, 32>}, {pipeline_mode = #tpu.pipeline_mode<synchronous>, transform_indices = @transform_1, window_bounds = array<i64: 32, 256>}, {pipeline_mode = #tpu.pipeline_mode<synchronous>, transform_indices = @transform_2, window_bounds = array<i64: 256, 128>}, {pipeline_mode = #tpu.pipeline_mode<synchronous>, transform_indices = @transform_3, window_bounds = array<i64: 128, 256>}, {pipeline_mode = #tpu.pipeline_mode<synchronous>, transform_indices = @transform_4, window_bounds = array<i64: 1, 640>}, {transform_indices = @transform_5, window_bounds = array<i64: 8, 256>}]} {
    %c0 = arith.constant 0 : index
    %c0_0 = arith.constant 0 : index
    %0 = vector.load %arg5[%c0, %c0_0] : memref<1x640xf32, #tpu.memory_space<vmem>>, vector<1x256xf32>
    %c0_1 = arith.constant 0 : index
    %c256 = arith.constant 256 : index
    %1 = vector.load %arg5[%c0_1, %c256] : memref<1x640xf32, #tpu.memory_space<vmem>>, vector<1x128xf32>
    %c0_2 = arith.constant 0 : index
    %c384 = arith.constant 384 : index
    %2 = vector.load %arg5[%c0_2, %c384] : memref<1x640xf32, #tpu.memory_space<vmem>>, vector<1x256xf32>
    %c0_3 = arith.constant 0 : index
    %c0_4 = arith.constant 0 : index
    %3 = vector.load %arg1[%c0_3, %c0_4] : memref<8x32xf32, #tpu.memory_space<vmem>>, vector<8x32xf32>
    %4 = arith.truncf %3 : vector<8x32xf32> to vector<8x32xbf16>
    %c0_5 = arith.constant 0 : index
    %c0_6 = arith.constant 0 : index
    %5 = vector.load %arg2[%c0_5, %c0_6] : memref<32x256xbf16, #tpu.memory_space<vmem>>, vector<32x256xbf16>
    %cst = arith.constant dense<0.000000e+00> : vector<8x256xf32>
    %6 = tpu.matmul %4, %5, %cst {dimension_numbers = #tpu.dot_dimension_numbers<[1], [0], [0], [1], [0, 0, 1, 1], [], []>} : vector<8x32xbf16>, vector<32x256xbf16>, vector<8x256xf32> -> vector<8x256xf32>
    %7 = vector.broadcast %0 : vector<1x256xf32> to vector<8x256xf32>
    %8 = arith.addf %6, %7 : vector<8x256xf32>
    %cst_7 = arith.constant 0.000000e+00 : f32
    %9 = vector.broadcast %cst_7 : f32 to vector<8x256xf32>
    %10 = arith.maximumf %8, %9 : vector<8x256xf32>
    %11 = arith.truncf %10 : vector<8x256xf32> to vector<8x256xbf16>
    %c0_8 = arith.constant 0 : index
    %c0_9 = arith.constant 0 : index
    %12 = vector.load %arg3[%c0_8, %c0_9] : memref<256x128xbf16, #tpu.memory_space<vmem>>, vector<256x128xbf16>
    %cst_10 = arith.constant dense<0.000000e+00> : vector<8x128xf32>
    %13 = tpu.matmul %11, %12, %cst_10 {dimension_numbers = #tpu.dot_dimension_numbers<[1], [0], [0], [1], [0, 0, 1, 1], [], []>} : vector<8x256xbf16>, vector<256x128xbf16>, vector<8x128xf32> -> vector<8x128xf32>
    %14 = vector.broadcast %1 : vector<1x128xf32> to vector<8x128xf32>
    %15 = arith.addf %13, %14 : vector<8x128xf32>
    %cst_11 = arith.constant 0.000000e+00 : f32
    %16 = vector.broadcast %cst_11 : f32 to vector<8x128xf32>
    %17 = arith.maximumf %15, %16 : vector<8x128xf32>
    %18 = arith.truncf %17 : vector<8x128xf32> to vector<8x128xbf16>
    %c0_12 = arith.constant 0 : index
    %c0_13 = arith.constant 0 : index
    %19 = vector.load %arg4[%c0_12, %c0_13] : memref<128x256xbf16, #tpu.memory_space<vmem>>, vector<128x256xbf16>
    %cst_14 = arith.constant dense<0.000000e+00> : vector<8x256xf32>
    %20 = tpu.matmul %18, %19, %cst_14 {dimension_numbers = #tpu.dot_dimension_numbers<[1], [0], [0], [1], [0, 0, 1, 1], [], []>} : vector<8x128xbf16>, vector<128x256xbf16>, vector<8x256xf32> -> vector<8x256xf32>
    %21 = vector.broadcast %2 : vector<1x256xf32> to vector<8x256xf32>
    %22 = arith.addf %20, %21 : vector<8x256xf32>
    %23 = vector.extract_strided_slice %22 {offsets = [0, 0], sizes = [8, 128], strides = [1, 1]} : vector<8x256xf32> to vector<8x128xf32>
    %c0_15 = arith.constant 0 : index
    %c0_16 = arith.constant 0 : index
    %24 = vector.load %arg6[%c0_15, %c0_16] : memref<8x256xf32, #tpu.memory_space<vmem>>, vector<8x128xf32>
    tpu.vector_store %arg6[%c0_15, %c0_16], %23 {strides = array<i32>} : memref<8x256xf32, #tpu.memory_space<vmem>>, vector<8x128xf32>,
    %25 = vector.extract_strided_slice %22 {offsets = [0, 128], sizes = [8, 128], strides = [1, 1]} : vector<8x256xf32> to vector<8x128xf32>
    %cst_17 = arith.constant -5.000000e+00 : f32
    %cst_18 = arith.constant 2.000000e+00 : f32
    %26 = vector.broadcast %cst_17 : f32 to vector<8x128xf32>
    %27 = arith.maximumf %26, %25 : vector<8x128xf32>
    %28 = vector.broadcast %cst_18 : f32 to vector<8x128xf32>
    %29 = arith.minimumf %28, %27 : vector<8x128xf32>
    %30 = math.exp %29 : vector<8x128xf32>
    %c0_19 = arith.constant 0 : index
    %c128 = arith.constant 128 : index
    %31 = vector.load %arg6[%c0_19, %c128] : memref<8x256xf32, #tpu.memory_space<vmem>>, vector<8x128xf32>
    tpu.vector_store %arg6[%c0_19, %c128], %30 {strides = array<i32>} : memref<8x256xf32, #tpu.memory_space<vmem>>, vector<8x128xf32>,
    return
  }
  func.func @transform_0(%arg0: i32) -> (i32, i32) {
    %c0_i32 = arith.constant 0 : i32
    %c0_i32_0 = arith.constant 0 : i32
    return %arg0, %c0_i32 : i32, i32
  }
  func.func @transform_1(%arg0: i32) -> (i32, i32) {
    %c0_i32 = arith.constant 0 : i32
    %c0_i32_0 = arith.constant 0 : i32
    %c0_i32_1 = arith.constant 0 : i32
    return %c0_i32, %c0_i32_0 : i32, i32
  }
  func.func @transform_2(%arg0: i32) -> (i32, i32) {
    %c0_i32 = arith.constant 0 : i32
    %c0_i32_0 = arith.constant 0 : i32
    %c0_i32_1 = arith.constant 0 : i32
    return %c0_i32, %c0_i32_0 : i32, i32
  }
  func.func @transform_3(%arg0: i32) -> (i32, i32) {
    %c0_i32 = arith.constant 0 : i32
    %c0_i32_0 = arith.constant 0 : i32
    %c0_i32_1 = arith.constant 0 : i32
    return %c0_i32, %c0_i32_0 : i32, i32
  }
  func.func @transform_4(%arg0: i32) -> (i32, i32) {
    %c0_i32 = arith.constant 0 : i32
    %c0_i32_0 = arith.constant 0 : i32
    %c0_i32_1 = arith.constant 0 : i32
    return %c0_i32, %c0_i32_0 : i32, i32
  }
  func.func @transform_5(%arg0: i32) -> (i32, i32) {
    %c0_i32 = arith.constant 0 : i32
    %c0_i32_0 = arith.constant 0 : i32
    return %arg0, %c0_i32 : i32, i32
  }
}

</mosaic_0001>

<llo_original>
// kernel: mujoco_policy_forward.1
$region0: #{mujoco_policy_forward.1}
  #allocation0 [shape = 'u32[]', space=smem, size = 0x4, offset = 0x4, fixed_abs, tag = 'smem constant byte address 0x4 - core index']
  #allocation1 [shape = 'u32[144,128]{1,0:T(1,128)}', space=vmem, size = 0x12000, scoped, tag = 'internal scratch']
  %s0 = inlined_call_operand.hbm [shape: f32[8,32], index: 0, kind: input, shape index: {}]
  %s1 = inlined_call_operand.hbm [shape: bf16[32,256], index: 1, kind: input, shape index: {}]
  %s2 = inlined_call_operand.hbm [shape: bf16[256,128], index: 2, kind: input, shape index: {}]
  %s3 = inlined_call_operand.hbm [shape: bf16[128,256], index: 3, kind: input, shape index: {}]
  %s4 = inlined_call_operand.vmem [shape: f32[1,640], index: 4, kind: input, shape index: {}]
  %s5 = inlined_call_operand.vmem [shape: f32[8,256], index: 5, kind: output, shape index: {}]
  %s6 = sld [smem:[#allocation0]]
  $region46: #{mujoco_policy_forward.1} parent=0
    _
  %s8 = ssub.s32 1, %s6
  %s9 = scalar_select 0, %s8, %s6
  $region1: #{mujoco_policy_forward.1} parent=0
    #allocation2 [shape = 'u8[4096]{0}', space=vmem, size = 0x1000, scoped, tag = 'input window, operand 0, single buffered']
    #allocation3 [shape = 's32[1]{0}', space=sflag, size = 0x4, scoped, tag = 'scoped memory for mujoco_policy_forward.1']
    #allocation4 [shape = 'u8[16384]{0}', space=vmem, size = 0x4000, scoped, tag = 'input window, operand 1, single buffered']
    #allocation5 [shape = 's32[1]{0}', space=sflag, size = 0x4, scoped, tag = 'scoped memory for mujoco_policy_forward.1']
    #allocation6 [shape = 'u8[65536]{0}', space=vmem, size = 0x10000, scoped, tag = 'input window, operand 2, single buffered']
    #allocation7 [shape = 'u8[65536]{0}', space=vmem, size = 0x10000, scoped, tag = 'input window, operand 3, single buffered']
    #allocation8 [shape = 's32[1]{0}', space=sflag, size = 0x4, scoped, tag = 'scoped memory for mujoco_policy_forward.1']
    %10 = vsyncpa [#allocation3], 0
    %11 = vsyncpa [#allocation5], 0
    %12 = vsyncpa [#allocation8], 0
    // Predicated region
    $region2: #{mujoco_policy_forward.1} parent=1 // pred_check
      _
    $region3: #{mujoco_policy_forward.1} parent=1 // pred_check_branch
      %14 = sbr.rel (0) target = $region5
    $region4: #{mujoco_policy_forward.1} parent=1 // pred_region
      %s16 = ssub.s32 128, 128
      %17 = vsyncadd [#allocation3], %s16
      %s19 = sshll.u32 [#allocation2], 4
      %s20 = int_to_ptr.vmem [resolvable:$true] %s19
      %22 = dma.hbm_to_vmem [thread:$0]  %s0, 128, %s20, [#allocation3]
    $region5: #{mujoco_policy_forward.1} parent=1 // pred_fallthru
      _
    // Predicated region
    $region6: #{mujoco_policy_forward.1} parent=1 // pred_check
      _
    $region7: #{mujoco_policy_forward.1} parent=1 // pred_check_branch
      %24 = sbr.rel (0) target = $region9
    $region8: #{mujoco_policy_forward.1} parent=1 // pred_region
      %s26 = ssub.s32 512, 512
      %27 = vsyncadd [#allocation5], %s26
      %s28 = sshll.u32 [#allocation4], 4
      %s29 = int_to_ptr.vmem [resolvable:$true] %s28
      %34 = dma.hbm_to_vmem [thread:$0]  %s1, 512, %s29, [#allocation5], 128, 128, 8
    $region9: #{mujoco_policy_forward.1} parent=1 // pred_fallthru
      _
    // Predicated region
    $region10: #{mujoco_policy_forward.1} parent=1 // pred_check
      _
    $region11: #{mujoco_policy_forward.1} parent=1 // pred_check_branch
      %36 = sbr.rel (0) target = $region13
    $region12: #{mujoco_policy_forward.1} parent=1 // pred_region
      %s38 = ssub.s32 2048, 2048
      %39 = vsyncadd [#allocation5], %s38
      %s40 = sshll.u32 [#allocation6], 4
      %s41 = int_to_ptr.vmem [resolvable:$true] %s40
      %46 = dma.hbm_to_vmem [thread:$0]  %s2, 2048, %s41, [#allocation5], 64, 64, 4
    $region13: #{mujoco_policy_forward.1} parent=1 // pred_fallthru
      _
    // Predicated region
    $region14: #{mujoco_policy_forward.1} parent=1 // pred_check
      _
    $region15: #{mujoco_policy_forward.1} parent=1 // pred_check_branch
      %48 = sbr.rel (0) target = $region17
    $region16: #{mujoco_policy_forward.1} parent=1 // pred_region
      %s50 = ssub.s32 2048, 2048
      %51 = vsyncadd [#allocation8], %s50
      %s52 = sshll.u32 [#allocation7], 4
      %s53 = int_to_ptr.vmem [resolvable:$true] %s52
      %58 = dma.hbm_to_vmem [thread:$0]  %s3, 2048, %s53, [#allocation8], 128, 128, 8
    $region17: #{mujoco_policy_forward.1} parent=1 // pred_fallthru
      _
    // Predicated region
    $region18: #{mujoco_policy_forward.1} parent=1 // pred_check
      _
    $region19: #{mujoco_policy_forward.1} parent=1 // pred_check_branch
      %60 = sbr.rel (0) target = $region21
    $region20: #{mujoco_policy_forward.1} parent=1 // pred_region
      _
    $region21: #{mujoco_policy_forward.1} parent=1 // pred_fallthru
      _
    // Predicated region
    $region22: #{mujoco_policy_forward.1} parent=1 // pred_check
      _
    $region23: #{mujoco_policy_forward.1} parent=1 // pred_check_branch
      %62 = sbr.rel (0) target = $region25
    $region24: #{mujoco_policy_forward.1} parent=1 // pred_region
      %63 = dma.done [#allocation3], 128
    $region25: #{mujoco_policy_forward.1} parent=1 // pred_fallthru
      _
    // Predicated region
    $region26: #{mujoco_policy_forward.1} parent=1 // pred_check
      _
    $region27: #{mujoco_policy_forward.1} parent=1 // pred_check_branch
      %65 = sbr.rel (0) target = $region29
    $region28: #{mujoco_policy_forward.1} parent=1 // pred_region
      %66 = dma.done [#allocation5], 512
    $region29: #{mujoco_policy_forward.1} parent=1 // pred_fallthru
      _
    // Predicated region
    $region30: #{mujoco_policy_forward.1} parent=1 // pred_check
      _
    $region31: #{mujoco_policy_forward.1} parent=1 // pred_check_branch
      %68 = sbr.rel (0) target = $region33
    $region32: #{mujoco_policy_forward.1} parent=1 // pred_region
      %69 = dma.done [#allocation5], 2048
    $region33: #{mujoco_policy_forward.1} parent=1 // pred_fallthru
      _
    // Predicated region
    $region34: #{mujoco_policy_forward.1} parent=1 // pred_check
      _
    $region35: #{mujoco_policy_forward.1} parent=1 // pred_check_branch
      %71 = sbr.rel (0) target = $region37
    $region36: #{mujoco_policy_forward.1} parent=1 // pred_region
      %72 = dma.done [#allocation8], 2048
    $region37: #{mujoco_policy_forward.1} parent=1 // pred_fallthru
      _
    %v74 = vld [vmem:[%s4] sm:$0x3]
    %v75 = vld [vmem:[%s4 + $0x2] sm:$0x1]
    %v76 = vld [vmem:[%s4 + $0x3] sm:$0x3]
    %v77 = vld [vmem:[#allocation2] sm:$0xff]
    %v78 = vpack.c.bf16 %v77, %v77
    %v79 = vld [vmem:[#allocation4] sm:$0xff]
    %v80 = vld [vmem:[#allocation4 + $0x8] sm:$0xff]
    %v81 = vld [vmem:[#allocation4 + $0x10] sm:$0xff]
    %v82 = vld [vmem:[#allocation4 + $0x18] sm:$0xff]
    %v84 = vlaneseq
    %v85 = vshrl.u32 %v84, 7
    %v86 = vsub.s32 0, %v85
    %v87 = vrot.slane %v74, %v86
    %v88 = vlaneseq
    %v89 = vshrl.u32 %v88, 7
    %v90 = vsub.s32 1, %v89
    %v91 = vrot.slane %v74, %v90
    %v98 = vunpack.c.l.b16 %v79
    %v99 = vunpack.c.h.b16 %v79
    %v100 = vunpack.c.l.b16 %v80
    %v101 = vunpack.c.h.b16 %v80
    %v102 = vunpack.c.l.b16 %v81
    %v103 = vunpack.c.h.b16 %v81
    %v104 = vunpack.c.l.b16 %v82
    %v105 = vunpack.c.h.b16 %v82
    %v106 = vpack.c.b16 %v100, %v98
    %v107 = vpack.c.b16 %v101, %v99
    %v108 = vpack.c.b16 %v104, %v102
    %v109 = vpack.c.b16 %v105, %v103
    %vm114 = vcmask 261120
    %v116 = vsel %vm114, %v78, 0
    %118 = vmatprep.subr.bf16.mxu0 %v107
    %119 = vmatpush1.bf16.msra.mxu0 %v106
    %120 = vmatprep.subr.bf16.mxu0 %v109
    %121 = vmatpush1.bf16.msra.mxu0 %v108
    %122 = vmatprep.subr.bf16.mxu0 0
    %123 = vmatpush1.bf16.msra.mxu0 0
    %124 = vmatprep.subr.bf16.mxu0 0
    %125 = vmatpush1.bf16.msra.mxu0 0
    %126 = vmatprep.subr.bf16.mxu0 0
    %127 = vmatpush1.bf16.msra.mxu0 0
    %128 = vmatprep.subr.bf16.mxu0 0
    %129 = vmatpush1.bf16.msra.mxu0 0
    %130 = vmatprep.subr.bf16.mxu0 0
    %131 = vmatpush1.bf16.msra.mxu0 0
    %132 = vmatprep.subr.bf16.mxu0 0
    %133 = vmatpush1.bf16.msra.mxu0 0
    %134 = vmatprep.subr.bf16.mxu0 0
    %135 = vmatpush1.bf16.msra.mxu0 0
    %136 = vmatprep.subr.bf16.mxu0 0
    %137 = vmatpush1.bf16.msra.mxu0 0
    %138 = vmatprep.subr.bf16.mxu0 0
    %139 = vmatpush1.bf16.msra.mxu0 0
    %140 = vmatprep.subr.bf16.mxu0 0
    %141 = vmatpush1.bf16.msra.mxu0 0
    %142 = vmatprep.subr.bf16.mxu0 0
    %143 = vmatpush1.bf16.msra.mxu0 0
    %144 = vmatprep.subr.bf16.mxu0 0
    %145 = vmatpush1.bf16.msra.mxu0 0
    %146 = vmatprep.subr.bf16.mxu0 0
    %147 = vmatpush1.bf16.msra.mxu0 0
    %148 = vmatprep.subr.bf16.mxu0 0
    %149 = vmatpush1.bf16.msra.mxu0 0
    %150 = vmatprep.mubr.bf16.mxu0 0
    %151 = vmatmul.mubr.bf16.gmra.mrb[0].mxu0 %v116
    %v152 = vpop.f32.mrb[0].mxu0
    %v153 = vadd.f32 %v87, %v152
    %v154 = vpop.f32.mrb[0].mxu0
    %v155 = vadd.f32 %v91, %v154
    %v156 = vpop.f32.mrb[0].mxu0
    %v157 = vpop.f32.mrb[0].mxu0
    %158 = vdwg.mxu0
    %v159 = vmax.f32 %v153, 0.0
    %v160 = vmax.f32 %v155, 0.0
    %v161 = vpack.c.bf16 %v159, %v159
    %v162 = vpack.c.bf16 %v160, %v160
    %v163 = vld [vmem:[#allocation6] sm:$0xf]
    %v164 = vld [vmem:[#allocation6 + $0x4] sm:$0xf]
    %v165 = vld [vmem:[#allocation6 + $0x8] sm:$0xf]
    %v166 = vld [vmem:[#allocation6 + $0xc] sm:$0xf]
    %v167 = vld [vmem:[#allocation6 + $0x10] sm:$0xf]
    %v168 = vld [vmem:[#allocation6 + $0x14] sm:$0xf]
    %v169 = vld [vmem:[#allocation6 + $0x18] sm:$0xf]
    %v170 = vld [vmem:[#allocation6 + $0x1c] sm:$0xf]
    %v171 = vld [vmem:[#allocation6 + $0x20] sm:$0xf]
    %v172 = vld [vmem:[#allocation6 + $0x24] sm:$0xf]
    %v173 = vld [vmem:[#allocation6 + $0x28] sm:$0xf]
    %v174 = vld [vmem:[#allocation6 + $0x2c] sm:$0xf]
    %v175 = vld [vmem:[#allocation6 + $0x30] sm:$0xf]
    %v176 = vld [vmem:[#allocation6 + $0x34] sm:$0xf]
    %v177 = vld [vmem:[#allocation6 + $0x38] sm:$0xf]
    %v178 = vld [vmem:[#allocation6 + $0x3c] sm:$0xf]
    %v179 = vld [vmem:[#allocation6 + $0x40] sm:$0xf]
    %v180 = vld [vmem:[#allocation6 + $0x44] sm:$0xf]
    %v181 = vld [vmem:[#allocation6 + $0x48] sm:$0xf]
    %v182 = vld [vmem:[#allocation6 + $0x4c] sm:$0xf]
    %v183 = vld [vmem:[#allocation6 + $0x50] sm:$0xf]
    %v184 = vld [vmem:[#allocation6 + $0x54] sm:$0xf]
    %v185 = vld [vmem:[#allocation6 + $0x58] sm:$0xf]
    %v186 = vld [vmem:[#allocation6 + $0x5c] sm:$0xf]
    %v187 = vld [vmem:[#allocation6 + $0x60] sm:$0xf]
    %v188 = vld [vmem:[#allocation6 + $0x64] sm:$0xf]
    %v189 = vld [vmem:[#allocation6 + $0x68] sm:$0xf]
    %v190 = vld [vmem:[#allocation6 + $0x6c] sm:$0xf]
    %v191 = vld [vmem:[#allocation6 + $0x70] sm:$0xf]
    %v192 = vld [vmem:[#allocation6 + $0x74] sm:$0xf]
    %v193 = vld [vmem:[#allocation6 + $0x78] sm:$0xf]
    %v194 = vld [vmem:[#allocation6 + $0x7c] sm:$0xf]
    %v196 = vlaneseq
    %v197 = vshrl.u32 %v196, 7
    %v198 = vsub.s32 0, %v197
    %v199 = vrot.slane %v75, %v198
    %v233 = vunpack.c.l.b16 %v163
    %v234 = vunpack.c.l.b16 %v164
    %v235 = vunpack.c.l.b16 %v165
    %v236 = vunpack.c.l.b16 %v166
    %v237 = vunpack.c.l.b16 %v167
    %v238 = vunpack.c.l.b16 %v168
    %v239 = vunpack.c.l.b16 %v169
    %v240 = vunpack.c.l.b16 %v170
    %v241 = vunpack.c.l.b16 %v171
    %v242 = vunpack.c.l.b16 %v172
    %v243 = vunpack.c.l.b16 %v173
    %v244 = vunpack.c.l.b16 %v174
    %v245 = vunpack.c.l.b16 %v175
    %v246 = vunpack.c.l.b16 %v176
    %v247 = vunpack.c.l.b16 %v177
    %v248 = vunpack.c.l.b16 %v178
    %v249 = vunpack.c.l.b16 %v179
    %v250 = vunpack.c.l.b16 %v180
    %v251 = vunpack.c.l.b16 %v181
    %v252 = vunpack.c.l.b16 %v182
    %v253 = vunpack.c.l.b16 %v183
    %v254 = vunpack.c.l.b16 %v184
    %v255 = vunpack.c.l.b16 %v185
    %v256 = vunpack.c.l.b16 %v186
    %v257 = vunpack.c.l.b16 %v187
    %v258 = vunpack.c.l.b16 %v188
    %v259 = vunpack.c.l.b16 %v189
    %v260 = vunpack.c.l.b16 %v190
    %v261 = vunpack.c.l.b16 %v191
    %v262 = vunpack.c.l.b16 %v192
    %v263 = vunpack.c.l.b16 %v193
    %v264 = vunpack.c.l.b16 %v194
    %v265 = vpack.c.b16 %v234, %v233
    %v266 = vpack.c.b16 %v236, %v235
    %v267 = vpack.c.b16 %v238, %v237
    %v268 = vpack.c.b16 %v240, %v239
    %v269 = vpack.c.b16 %v242, %v241
    %v270 = vpack.c.b16 %v244, %v243
    %v271 = vpack.c.b16 %v246, %v245
    %v272 = vpack.c.b16 %v248, %v247
    %v273 = vpack.c.b16 %v250, %v249
    %v274 = vpack.c.b16 %v252, %v251
    %v275 = vpack.c.b16 %v254, %v253
    %v276 = vpack.c.b16 %v256, %v255
    %v277 = vpack.c.b16 %v258, %v257
    %v278 = vpack.c.b16 %v260, %v259
    %v279 = vpack.c.b16 %v262, %v261
    %v280 = vpack.c.b16 %v264, %v263
    %297 = vmatprep.subr.bf16.mxu0 0
    %298 = vmatpush1.bf16.msra.mxu0 %v265
    %299 = vmatprep.subr.bf16.mxu0 0
    %300 = vmatpush1.bf16.msra.mxu0 %v266
    %301 = vmatprep.subr.bf16.mxu0 0
    %302 = vmatpush1.bf16.msra.mxu0 %v267
    %303 = vmatprep.subr.bf16.mxu0 0
    %304 = vmatpush1.bf16.msra.mxu0 %v268
    %305 = vmatprep.subr.bf16.mxu0 0
    %306 = vmatpush1.bf16.msra.mxu0 %v269
    %307 = vmatprep.subr.bf16.mxu0 0
    %308 = vmatpush1.bf16.msra.mxu0 %v270
    %309 = vmatprep.subr.bf16.mxu0 0
    %310 = vmatpush1.bf16.msra.mxu0 %v271
    %311 = vmatprep.subr.bf16.mxu0 0
    %312 = vmatpush1.bf16.msra.mxu0 %v272
    %313 = vmatprep.subr.bf16.mxu0 0
    %314 = vmatpush1.bf16.msra.mxu0 %v273
    %315 = vmatprep.subr.bf16.mxu0 0
    %316 = vmatpush1.bf16.msra.mxu0 %v274
    %317 = vmatprep.subr.bf16.mxu0 0
    %318 = vmatpush1.bf16.msra.mxu0 %v275
    %319 = vmatprep.subr.bf16.mxu0 0
    %320 = vmatpush1.bf16.msra.mxu0 %v276
    %321 = vmatprep.subr.bf16.mxu0 0
    %322 = vmatpush1.bf16.msra.mxu0 %v277
    %323 = vmatprep.subr.bf16.mxu0 0
    %324 = vmatpush1.bf16.msra.mxu0 %v278
    %325 = vmatprep.subr.bf16.mxu0 0
    %326 = vmatpush1.bf16.msra.mxu0 %v279
    %327 = vmatprep.subr.bf16.mxu0 0
    %328 = vmatpush1.bf16.msra.mxu0 %v280
    %329 = vmatprep.mubr.bf16.mxu0 %v162
    %330 = vmatmul.mubr.bf16.gmra.mrb[0].mxu0 %v161
    %v331 = vpop.f32.mrb[0].mxu0
    %v332 = vadd.f32 %v199, %v331
    %v333 = vpop.f32.mrb[0].mxu0
    %v334 = vpop.f32.mrb[0].mxu0
    %v335 = vpop.f32.mrb[0].mxu0
    %336 = vdwg.mxu0
    %v337 = vmax.f32 %v332, 0.0
    %v338 = vpack.c.bf16 %v337, %v337
    %v339 = vld [vmem:[#allocation7] sm:$0xff]
    %v340 = vld [vmem:[#allocation7 + $0x8] sm:$0xff]
    %v341 = vld [vmem:[#allocation7 + $0x10] sm:$0xff]
    %v342 = vld [vmem:[#allocation7 + $0x18] sm:$0xff]
    %v343 = vld [vmem:[#allocation7 + $0x20] sm:$0xff]
    %v344 = vld [vmem:[#allocation7 + $0x28] sm:$0xff]
    %v345 = vld [vmem:[#allocation7 + $0x30] sm:$0xff]
    %v346 = vld [vmem:[#allocation7 + $0x38] sm:$0xff]
    %v347 = vld [vmem:[#allocation7 + $0x40] sm:$0xff]
    %v348 = vld [vmem:[#allocation7 + $0x48] sm:$0xff]
    %v349 = vld [vmem:[#allocation7 + $0x50] sm:$0xff]
    %v350 = vld [vmem:[#allocation7 + $0x58] sm:$0xff]
    %v351 = vld [vmem:[#allocation7 + $0x60] sm:$0xff]
    %v352 = vld [vmem:[#allocation7 + $0x68] sm:$0xff]
    %v353 = vld [vmem:[#allocation7 + $0x70] sm:$0xff]
    %v354 = vld [vmem:[#allocation7 + $0x78] sm:$0xff]
    %v356 = vlaneseq
    %v357 = vshrl.u32 %v356, 7
    %v358 = vsub.s32 0, %v357
    %v359 = vrot.slane %v76, %v358
    %v360 = vlaneseq
    %v361 = vshrl.u32 %v360, 7
    %v362 = vsub.s32 1, %v361
    %v363 = vrot.slane %v76, %v362
    %v382 = vunpack.c.l.b16 %v339
    %v383 = vunpack.c.h.b16 %v339
    %v384 = vunpack.c.l.b16 %v340
    %v385 = vunpack.c.h.b16 %v340
    %v386 = vunpack.c.l.b16 %v341
    %v387 = vunpack.c.h.b16 %v341
    %v388 = vunpack.c.l.b16 %v342
    %v389 = vunpack.c.h.b16 %v342
    %v390 = vunpack.c.l.b16 %v343
    %v391 = vunpack.c.h.b16 %v343
    %v392 = vunpack.c.l.b16 %v344
    %v393 = vunpack.c.h.b16 %v344
    %v394 = vunpack.c.l.b16 %v345
    %v395 = vunpack.c.h.b16 %v345
    %v396 = vunpack.c.l.b16 %v346
    %v397 = vunpack.c.h.b16 %v346
    %v398 = vunpack.c.l.b16 %v347
    %v399 = vunpack.c.h.b16 %v347
    %v400 = vunpack.c.l.b16 %v348
    %v401 = vunpack.c.h.b16 %v348
    %v402 = vunpack.c.l.b16 %v349
    %v403 = vunpack.c.h.b16 %v349
    %v404 = vunpack.c.l.b16 %v350
    %v405 = vunpack.c.h.b16 %v350
    %v406 = vunpack.c.l.b16 %v351
    %v407 = vunpack.c.h.b16 %v351
    %v408 = vunpack.c.l.b16 %v352
    %v409 = vunpack.c.h.b16 %v352
    %v410 = vunpack.c.l.b16 %v353
    %v411 = vunpack.c.h.b16 %v353
    %v412 = vunpack.c.l.b16 %v354
    %v413 = vunpack.c.h.b16 %v354
    %v414 = vpack.c.b16 %v384, %v382
    %v415 = vpack.c.b16 %v385, %v383
    %v416 = vpack.c.b16 %v388, %v386
    %v417 = vpack.c.b16 %v389, %v387
    %v418 = vpack.c.b16 %v392, %v390
    %v419 = vpack.c.b16 %v393, %v391
    %v420 = vpack.c.b16 %v396, %v394
    %v421 = vpack.c.b16 %v397, %v395
    %v422 = vpack.c.b16 %v400, %v398
    %v423 = vpack.c.b16 %v401, %v399
    %v424 = vpack.c.b16 %v404, %v402
    %v425 = vpack.c.b16 %v405, %v403
    %v426 = vpack.c.b16 %v408, %v406
    %v427 = vpack.c.b16 %v409, %v407
    %v428 = vpack.c.b16 %v412, %v410
    %v429 = vpack.c.b16 %v413, %v411
    %446 = vmatprep.subr.bf16.mxu0 %v415
    %447 = vmatpush1.bf16.msra.mxu0 %v414
    %448 = vmatprep.subr.bf16.mxu0 %v417
    %449 = vmatpush1.bf16.msra.mxu0 %v416
    %450 = vmatprep.subr.bf16.mxu0 %v419
    %451 = vmatpush1.bf16.msra.mxu0 %v418
    %452 = vmatprep.subr.bf16.mxu0 %v421
    %453 = vmatpush1.bf16.msra.mxu0 %v420
    %454 = vmatprep.subr.bf16.mxu0 %v423
    %455 = vmatpush1.bf16.msra.mxu0 %v422
    %456 = vmatprep.subr.bf16.mxu0 %v425
    %457 = vmatpush1.bf16.msra.mxu0 %v424
    %458 = vmatprep.subr.bf16.mxu0 %v427
    %459 = vmatpush1.bf16.msra.mxu0 %v426
    %460 = vmatprep.subr.bf16.mxu0 %v429
    %461 = vmatpush1.bf16.msra.mxu0 %v428
    %462 = vmatprep.subr.bf16.mxu0 0
    %463 = vmatpush1.bf16.msra.mxu0 0
    %464 = vmatprep.subr.bf16.mxu0 0
    %465 = vmatpush1.bf16.msra.mxu0 0
    %466 = vmatprep.subr.bf16.mxu0 0
    %467 = vmatpush1.bf16.msra.mxu0 0
    %468 = vmatprep.subr.bf16.mxu0 0
    %469 = vmatpush1.bf16.msra.mxu0 0
    %470 = vmatprep.subr.bf16.mxu0 0
    %471 = vmatpush1.bf16.msra.mxu0 0
    %472 = vmatprep.subr.bf16.mxu0 0
    %473 = vmatpush1.bf16.msra.mxu0 0
    %474 = vmatprep.subr.bf16.mxu0 0
    %475 = vmatpush1.bf16.msra.mxu0 0
    %476 = vmatprep.subr.bf16.mxu0 0
    %477 = vmatpush1.bf16.msra.mxu0 0
    %478 = vmatprep.mubr.bf16.mxu0 0
    %479 = vmatmul.mubr.bf16.gmra.mrb[0].mxu0 %v338
    %v480 = vpop.f32.mrb[0].mxu0
    %v481 = vadd.f32 %v359, %v480
    %v482 = vpop.f32.mrb[0].mxu0
    %v483 = vadd.f32 %v363, %v482
    %v484 = vpop.f32.mrb[0].mxu0
    %v485 = vpop.f32.mrb[0].mxu0
    %486 = vdwg.mxu0
    %487 = vst [vmem:[%s5] sm:$0xff] %v481
    %v488 = vmax.f32 %v483, -5.0
    %v489 = vmin.f32 %v488, 2.0
    %v490 = vmul.f32 %v489, 1.442695
    %v491 = vpow.pop %v490
    %492 = vst [vmem:[%s5 + $0x8] sm:$0xff] %v491
    // Predicated region
    $region38: #{mujoco_policy_forward.1} parent=1 // pred_check
      _
    $region39: #{mujoco_policy_forward.1} parent=1 // pred_check_branch
      %494 = sbr.rel (0) target = $region41
    $region40: #{mujoco_policy_forward.1} parent=1 // pred_region
      _
    $region41: #{mujoco_policy_forward.1} parent=1 // pred_fallthru
      _
    // Predicated region
    $region42: #{mujoco_policy_forward.1} parent=1 // pred_check
      _
    $region43: #{mujoco_policy_forward.1} parent=1 // pred_check_branch
      %496 = sbr.rel (0) target = $region45
    $region44: #{mujoco_policy_forward.1} parent=1 // pred_region
      _
    $region45: #{mujoco_policy_forward.1} parent=1 // pred_fallthru
      _
    %497 = vsyncpa [#allocation3], 1
    %498 = vsyncpa [#allocation5], 1
    %499 = vsyncpa [#allocation8], 1

</llo_original>
